<compile_context>
chip_gen: v7x
topology: tpu7x:2x2x1
jax: 0.10.0
libtpu: 0.0.40
codegen_flags: <defaults>
</compile_context>

<pallas_src>
import functools
import math

import jax
import jax.numpy as jnp
from jax import lax
from jax.experimental import pallas as pl
from jax.experimental.pallas import tpu as pltpu


# ----------------------------- Pallas kernel -------------------------------
def _critic_kernel(s_ref, a_ref, w1_ref, b12_ref, w2_ref, w3_ref, b3_ref,
                   o_ref, *, n_state, n_action, n_output):
    # Activations are feature-major: s [n_state, B], a [n_action, B].
    s = s_ref[...].astype(jnp.float32)       # torch .float() happens in-kernel
    a = a_ref[...].astype(jnp.float32)
    w1 = w1_ref[...]                          # [F, n_state + n_action] (torch [out, in])
    b12 = b12_ref[...]                        # [F, 2]  (column 0 = b1, column 1 = b2)

    # --- layer 1: W1 @ cat(state, action) + b1, ReLU -------------------------
    # K = n_state + n_action is tiny (4 for pendulum) -> expand the matmul into
    # broadcast FMAs on the VPU instead of an MXU pass with an almost-empty K.
    h1 = w1[:, 0:1] * s[0:1, :]                                   # [F, B]
    for k in range(1, n_state):
        h1 = h1 + w1[:, k:k + 1] * s[k:k + 1, :]
    for j in range(n_action):
        c = n_state + j
        h1 = h1 + w1[:, c:c + 1] * a[j:j + 1, :]
    h1 = jnp.maximum(h1 + b12[:, 0:1], 0.0)                       # ReLU

    # --- layer 2: W2 @ h1 + b2, ReLU  (MXU, N = batch -> lane-dense) ---------
    h2 = jnp.dot(w2_ref[...], h1, preferred_element_type=jnp.float32)
    h2 = jnp.maximum(h2 + b12[:, 1:2], 0.0)                       # ReLU

    # --- head: W3 @ h2 + b3 ---------------------------------------------------
    if n_output == 1:
        # 32 -> 1 Linear as VPU multiply + sublane reduction (w3 stored [F, 1]).
        q = jnp.sum(h2 * w3_ref[...], axis=0, keepdims=True) + b3_ref[...]
    else:
        # General head: contract over features (dim 0 of both operands).
        q = lax.dot_general(w3_ref[...], h2,
                            dimension_numbers=(((0,), (0,)), ((), ())),
                            preferred_element_type=jnp.float32) + b3_ref[...]

    o_ref[...] = q.astype(o_ref.dtype)        # [n_output, B]: lane-dense stores


def _pick_batch_tile(batch, cap=8192):
    """Single block (grid=(1,)) for any realistic batch; tile only beyond cap."""
    if batch <= cap:
        return batch
    tile = (cap // 128) * 128
    while tile >= 128 and batch % tile != 0:
        tile -= 128
    return tile if (tile >= 128 and batch % tile == 0) else batch


def critic_forward(state, action, params, *, tile_b=None):
    """Pallas-backed forward pass of CriticNetwork (f32).

    state:  [B, n_state], action: [B, n_action]
    params: dict with w1 [F, n_state+n_action] (torch [out, in]), b12 [F, 2],
            w2 [F, F] (torch [out, in]), w3 [F, n_out] ([in, out]), b3 [n_out, 1].
    Returns q with all size-1 dims squeezed (mirrors torch.squeeze).
    """
    batch, n_state = state.shape
    n_action = action.shape[1]
    n_features, n_input = params["w1"].shape
    n_output = params["w3"].shape[1]
    assert n_input == n_state + n_action

    if tile_b is None:
        tile_b = _pick_batch_tile(batch)
    assert batch % tile_b == 0
    assert tile_b == batch or tile_b % 128 == 0, "batch tile must be lane-aligned"
    grid = (batch // tile_b,)

    # Layout plumbing (tiny, O(KB)): present activations feature-major so the
    # batch sits on the 128-lane axis inside the kernel.
    s_t = jnp.transpose(state)                # [n_state, B]
    a_t = jnp.transpose(action)               # [n_action, B]

    kernel = functools.partial(_critic_kernel, n_state=n_state,
                               n_action=n_action, n_output=n_output)

    batched = lambda rows: pl.BlockSpec((rows, tile_b), lambda i: (0, i))
    whole = lambda shape: pl.BlockSpec(shape, lambda i: (0, 0))

    flops = 2 * batch * (n_input * n_features + n_features * n_features
                         + n_features * n_output)
    bytes_accessed = 4 * (batch * (n_input + n_output)
                          + n_features * (n_input + 2 + n_features + n_output)
                          + n_output)

    out = pl.pallas_call(
        kernel,
        out_shape=jax.ShapeDtypeStruct((n_output, batch), jnp.float32),
        grid=grid,
        in_specs=[
            batched(n_state),                     # state  [n_state, tile_b]
            batched(n_action),                    # action [n_action, tile_b]
            whole((n_features, n_input)),         # w1  (resident)
            whole((n_features, 2)),               # b1|b2 packed
            whole((n_features, n_features)),      # w2
            whole((n_features, n_output)),        # w3 ([in, out])
            whole((n_output, 1)),                 # b3
        ],
        out_specs=batched(n_output),
        compiler_params=pltpu.CompilerParams(
            # Single grid step by default -> no megacore split for this
            # latency-bound micro-kernel; parallel only on the huge-batch
            # multi-block fallback where it is genuinely throughput-bound.
            dimension_semantics=("parallel",) if grid[0] > 1 else ("arbitrary",)),
        cost_estimate=pl.CostEstimate(flops=flops, transcendentals=0,
                                      bytes_accessed=bytes_accessed),
    )(s_t, a_t, params["w1"], params["b12"], params["w2"],
      params["w3"], params["b3"])

    # [n_out, B] -> [B, n_out] (pure reshape for n_out == 1), then torch.squeeze.
    return jnp.squeeze(jnp.transpose(out))


# ------------------------- deterministic init ------------------------------
def _xavier_uniform(key, fan_in, fan_out, gain, shape):
    limit = gain * math.sqrt(6.0 / (fan_in + fan_out))
    return jax.random.uniform(key, shape, dtype=jnp.float32,
                              minval=-limit, maxval=limit)


def _linear_bias(key, fan_in, shape):
    # PyTorch nn.Linear default bias init: U(-1/sqrt(fan_in), 1/sqrt(fan_in)).
    bound = 1.0 / math.sqrt(fan_in)
    return jax.random.uniform(key, shape, dtype=jnp.float32,
                              minval=-bound, maxval=bound)


def init_critic_params(key, n_state, n_action, n_features, n_output):
    n_input = n_state + n_action
    k = jax.random.split(key, 6)
    relu_gain = math.sqrt(2.0)   # nn.init.calculate_gain('relu')
    lin_gain = 1.0               # nn.init.calculate_gain('linear')
    w1 = _xavier_uniform(k[0], n_input, n_features, relu_gain,
                         (n_features, n_input))          # torch [out, in]
    b1 = _linear_bias(k[1], n_input, (n_features, 1))
    w2 = _xavier_uniform(k[2], n_features, n_features, relu_gain,
                         (n_features, n_features))        # torch [out, in]
    b2 = _linear_bias(k[3], n_features, (n_features, 1))
    # W3 stored [in, out]: the Xavier limit is symmetric in fan_in/fan_out, so
    # initializing the transpose directly is distribution-identical.
    w3 = _xavier_uniform(k[4], n_features, n_output, lin_gain,
                         (n_features, n_output))
    b3 = _linear_bias(k[5], n_features, (n_output, 1))
    return {"w1": w1, "b12": jnp.concatenate([b1, b2], axis=1),
            "w2": w2, "w3": w3, "b3": b3}


# ----------------------------- pure-JAX reference ---------------------------
def critic_reference(state, action, params):
    x = jnp.concatenate([state.astype(jnp.float32), action.astype(jnp.float32)],
                        axis=1)
    h1 = jax.nn.relu(x @ params["w1"].T + params["b12"][:, 0])
    h2 = jax.nn.relu(h1 @ params["w2"].T + params["b12"][:, 1])
    q = h2 @ params["w3"] + params["b3"][:, 0]
    return jnp.squeeze(q)


# --------------------------------- main -------------------------------------
if __name__ == "__main__":
    # Pendulum: state dim 3, action dim 1; critic outputs scalar Q.
    batch = 8
    n_state, n_action = 3, 1
    n_features, n_output = 32, 1

    key = jax.random.PRNGKey(0)
    k_param, k_state, k_action = jax.random.split(key, 3)
    params = init_critic_params(k_param, n_state, n_action, n_features, n_output)

    state = jax.random.normal(k_state, (batch, n_state), dtype=jnp.float32)
    action = jax.random.normal(k_action, (batch, n_action), dtype=jnp.float32)

    q = jax.block_until_ready(critic_forward(state, action, params))
    assert q.shape == (batch,), q.shape
    assert jnp.allclose(q, critic_reference(state, action, params),
                        atol=1e-5, rtol=1e-5)

    # Replay-buffer-sized batch: still a single grid step (latency-optimal).
    big = 256
    ks, ka = jax.random.split(jax.random.PRNGKey(1))
    s_big = jax.random.normal(ks, (big, n_state), dtype=jnp.float32)
    a_big = jax.random.normal(ka, (big, n_action), dtype=jnp.float32)
    q_big = jax.block_until_ready(critic_forward(s_big, a_big, params))
    assert q_big.shape == (big,), q_big.shape
    assert jnp.allclose(q_big, critic_reference(s_big, a_big, params),
                        atol=1e-5, rtol=1e-5)

    # Exercise the multi-block fallback path (only used for very large batches).
    q_tiled = jax.block_until_ready(
        critic_forward(s_big, a_big, params, tile_b=128))
    assert jnp.allclose(q_tiled, q_big, atol=1e-6, rtol=1e-6)

    print("KERNEL_OK")
</pallas_src>

<mosaic_0001>
module attributes {stable_mosaic.version = 11 : i64} {
  func.func @_critic_kernel(%arg0: i32, %arg1: memref<3x8xf32, #tpu.memory_space<vmem>>, %arg2: memref<1x8xf32, #tpu.memory_space<vmem>>, %arg3: memref<32x4xf32, #tpu.memory_space<vmem>>, %arg4: memref<32x2xf32, #tpu.memory_space<vmem>>, %arg5: memref<32x32xf32, #tpu.memory_space<vmem>>, %arg6: memref<32x1xf32, #tpu.memory_space<vmem>>, %arg7: memref<1x1xf32, #tpu.memory_space<vmem>>, %arg8: memref<1x8xf32, #tpu.memory_space<vmem>>) attributes {dimension_semantics = [#tpu.dimension_semantics<arbitrary>], iteration_bounds = array<i64: 1>, scalar_prefetch = 0 : i64, scratch_operands = 0 : i64, tpu.core_type = #tpu.core_type<tc>, window_params = [{transform_indices = @transform_0, window_bounds = array<i64: 3, 8>}, {transform_indices = @transform_1, window_bounds = array<i64: 1, 8>}, {pipeline_mode = #tpu.pipeline_mode<synchronous>, transform_indices = @transform_2, window_bounds = array<i64: 32, 4>}, {pipeline_mode = #tpu.pipeline_mode<synchronous>, transform_indices = @transform_3, window_bounds = array<i64: 32, 2>}, {pipeline_mode = #tpu.pipeline_mode<synchronous>, transform_indices = @transform_4, window_bounds = array<i64: 32, 32>}, {pipeline_mode = #tpu.pipeline_mode<synchronous>, transform_indices = @transform_5, window_bounds = array<i64: 32, 1>}, {pipeline_mode = #tpu.pipeline_mode<synchronous>, transform_indices = @transform_6, window_bounds = array<i64: 1, 1>}, {transform_indices = @transform_7, window_bounds = array<i64: 1, 8>}]} {
    %c0 = arith.constant 0 : index
    %c0_0 = arith.constant 0 : index
    %0 = vector.load %arg1[%c0, %c0_0] : memref<3x8xf32, #tpu.memory_space<vmem>>, vector<3x8xf32>
    %c0_1 = arith.constant 0 : index
    %c0_2 = arith.constant 0 : index
    %1 = vector.load %arg2[%c0_1, %c0_2] : memref<1x8xf32, #tpu.memory_space<vmem>>, vector<1x8xf32>
    %c0_3 = arith.constant 0 : index
    %c0_4 = arith.constant 0 : index
    %2 = vector.load %arg3[%c0_3, %c0_4] : memref<32x4xf32, #tpu.memory_space<vmem>>, vector<32x4xf32>
    %c0_5 = arith.constant 0 : index
    %c0_6 = arith.constant 0 : index
    %3 = vector.load %arg4[%c0_5, %c0_6] : memref<32x2xf32, #tpu.memory_space<vmem>>, vector<32x2xf32>
    %4 = vector.extract_strided_slice %2 {offsets = [0, 0], sizes = [32, 1], strides = [1, 1]} : vector<32x4xf32> to vector<32x1xf32>
    %5 = vector.extract_strided_slice %0 {offsets = [0, 0], sizes = [1, 8], strides = [1, 1]} : vector<3x8xf32> to vector<1x8xf32>
    %6 = vector.broadcast %4 : vector<32x1xf32> to vector<32x8xf32>
    %7 = vector.broadcast %5 : vector<1x8xf32> to vector<32x8xf32>
    %8 = arith.mulf %6, %7 : vector<32x8xf32>
    %9 = vector.extract_strided_slice %2 {offsets = [0, 1], sizes = [32, 1], strides = [1, 1]} : vector<32x4xf32> to vector<32x1xf32>
    %10 = vector.extract_strided_slice %0 {offsets = [1, 0], sizes = [1, 8], strides = [1, 1]} : vector<3x8xf32> to vector<1x8xf32>
    %11 = vector.broadcast %9 : vector<32x1xf32> to vector<32x8xf32>
    %12 = vector.broadcast %10 : vector<1x8xf32> to vector<32x8xf32>
    %13 = arith.mulf %11, %12 : vector<32x8xf32>
    %14 = arith.addf %8, %13 : vector<32x8xf32>
    %15 = vector.extract_strided_slice %2 {offsets = [0, 2], sizes = [32, 1], strides = [1, 1]} : vector<32x4xf32> to vector<32x1xf32>
    %16 = vector.extract_strided_slice %0 {offsets = [2, 0], sizes = [1, 8], strides = [1, 1]} : vector<3x8xf32> to vector<1x8xf32>
    %17 = vector.broadcast %15 : vector<32x1xf32> to vector<32x8xf32>
    %18 = vector.broadcast %16 : vector<1x8xf32> to vector<32x8xf32>
    %19 = arith.mulf %17, %18 : vector<32x8xf32>
    %20 = arith.addf %14, %19 : vector<32x8xf32>
    %21 = vector.extract_strided_slice %2 {offsets = [0, 3], sizes = [32, 1], strides = [1, 1]} : vector<32x4xf32> to vector<32x1xf32>
    %22 = vector.broadcast %21 : vector<32x1xf32> to vector<32x8xf32>
    %23 = vector.broadcast %1 : vector<1x8xf32> to vector<32x8xf32>
    %24 = arith.mulf %22, %23 : vector<32x8xf32>
    %25 = arith.addf %20, %24 : vector<32x8xf32>
    %26 = vector.extract_strided_slice %3 {offsets = [0, 0], sizes = [32, 1], strides = [1, 1]} : vector<32x2xf32> to vector<32x1xf32>
    %27 = vector.broadcast %26 : vector<32x1xf32> to vector<32x8xf32>
    %28 = arith.addf %25, %27 : vector<32x8xf32>
    %cst = arith.constant 0.000000e+00 : f32
    %29 = vector.broadcast %cst : f32 to vector<32x8xf32>
    %30 = arith.maximumf %28, %29 : vector<32x8xf32>
    %c0_7 = arith.constant 0 : index
    %c0_8 = arith.constant 0 : index
    %31 = vector.load %arg5[%c0_7, %c0_8] : memref<32x32xf32, #tpu.memory_space<vmem>>, vector<32x32xf32>
    %cst_9 = arith.constant dense<0.000000e+00> : vector<32x8xf32>
    %32 = tpu.matmul %31, %30, %cst_9 {dimension_numbers = #tpu.dot_dimension_numbers<[1], [0], [0], [1], [0, 0, 1, 1], [], []>} : vector<32x32xf32>, vector<32x8xf32>, vector<32x8xf32> -> vector<32x8xf32>
    %33 = vector.extract_strided_slice %3 {offsets = [0, 1], sizes = [32, 1], strides = [1, 1]} : vector<32x2xf32> to vector<32x1xf32>
    %34 = vector.broadcast %33 : vector<32x1xf32> to vector<32x8xf32>
    %35 = arith.addf %32, %34 : vector<32x8xf32>
    %cst_10 = arith.constant 0.000000e+00 : f32
    %36 = vector.broadcast %cst_10 : f32 to vector<32x8xf32>
    %37 = arith.maximumf %35, %36 : vector<32x8xf32>
    %c0_11 = arith.constant 0 : index
    %c0_12 = arith.constant 0 : index
    %38 = vector.load %arg6[%c0_11, %c0_12] : memref<32x1xf32, #tpu.memory_space<vmem>>, vector<32x1xf32>
    %39 = vector.broadcast %38 : vector<32x1xf32> to vector<32x8xf32>
    %40 = arith.mulf %37, %39 : vector<32x8xf32>
    %cst_13 = arith.constant dense<0.000000e+00> : vector<8xf32>
    %41 = vector.multi_reduction <add>, %40, %cst_13 [0] : vector<32x8xf32> to vector<8xf32>
    %42 = vector.shape_cast %41 : vector<8xf32> to vector<1x8xf32>
    %c0_14 = arith.constant 0 : index
    %c0_15 = arith.constant 0 : index
    %43 = vector.load %arg7[%c0_14, %c0_15] : memref<1x1xf32, #tpu.memory_space<vmem>>, vector<1x1xf32>
    %44 = vector.broadcast %43 : vector<1x1xf32> to vector<1x8xf32>
    %45 = arith.addf %42, %44 : vector<1x8xf32>
    %c0_16 = arith.constant 0 : index
    %c0_17 = arith.constant 0 : index
    %46 = vector.load %arg8[%c0_16, %c0_17] : memref<1x8xf32, #tpu.memory_space<vmem>>, vector<1x8xf32>
    tpu.vector_store %arg8[%c0_16, %c0_17], %45 {strides = array<i32>} : memref<1x8xf32, #tpu.memory_space<vmem>>, vector<1x8xf32>,
    return
  }
  func.func @transform_0(%arg0: i32) -> (i32, i32) {
    %c0_i32 = arith.constant 0 : i32
    %c0_i32_0 = arith.constant 0 : i32
    return %c0_i32, %arg0 : i32, i32
  }
  func.func @transform_1(%arg0: i32) -> (i32, i32) {
    %c0_i32 = arith.constant 0 : i32
    %c0_i32_0 = arith.constant 0 : i32
    return %c0_i32, %arg0 : i32, i32
  }
  func.func @transform_2(%arg0: i32) -> (i32, i32) {
    %c0_i32 = arith.constant 0 : i32
    %c0_i32_0 = arith.constant 0 : i32
    %c0_i32_1 = arith.constant 0 : i32
    return %c0_i32, %c0_i32_0 : i32, i32
  }
  func.func @transform_3(%arg0: i32) -> (i32, i32) {
    %c0_i32 = arith.constant 0 : i32
    %c0_i32_0 = arith.constant 0 : i32
    %c0_i32_1 = arith.constant 0 : i32
    return %c0_i32, %c0_i32_0 : i32, i32
  }
  func.func @transform_4(%arg0: i32) -> (i32, i32) {
    %c0_i32 = arith.constant 0 : i32
    %c0_i32_0 = arith.constant 0 : i32
    %c0_i32_1 = arith.constant 0 : i32
    return %c0_i32, %c0_i32_0 : i32, i32
  }
  func.func @transform_5(%arg0: i32) -> (i32, i32) {
    %c0_i32 = arith.constant 0 : i32
    %c0_i32_0 = arith.constant 0 : i32
    %c0_i32_1 = arith.constant 0 : i32
    return %c0_i32, %c0_i32_0 : i32, i32
  }
  func.func @transform_6(%arg0: i32) -> (i32, i32) {
    %c0_i32 = arith.constant 0 : i32
    %c0_i32_0 = arith.constant 0 : i32
    %c0_i32_1 = arith.constant 0 : i32
    return %c0_i32, %c0_i32_0 : i32, i32
  }
  func.func @transform_7(%arg0: i32) -> (i32, i32) {
    %c0_i32 = arith.constant 0 : i32
    %c0_i32_0 = arith.constant 0 : i32
    return %c0_i32, %arg0 : i32, i32
  }
}

</mosaic_0001>

<llo_original>
// kernel: tpu_custom_call.1
$region0: #{tpu_custom_call.1}
  #allocation0 [shape = 'u32[]', space=smem, size = 0x4, offset = 0x4, fixed_abs, tag = 'smem constant byte address 0x4 - core index']
  #allocation1 [shape = 'u32[144,128]{1,0:T(1,128)}', space=vmem, size = 0x12000, scoped, tag = 'internal scratch']
  #allocation2 [shape = 'f32[1,1]{1,0:T(1,128)S(1)}', space=vmem, size = 0x200, scoped, tag = 'scoped memory for tpu_custom_call.1']
  %s0 = inlined_call_operand.vmem [shape: f32[3,8], index: 0, kind: input, shape index: {}]
  %s1 = inlined_call_operand.vmem [shape: f32[1,8], index: 1, kind: input, shape index: {}]
  %s2 = inlined_call_operand.vmem [shape: f32[32,4], index: 2, kind: input, shape index: {}]
  %s3 = inlined_call_operand.vmem [shape: f32[32,2], index: 3, kind: input, shape index: {}]
  %s4 = inlined_call_operand.vmem [shape: f32[32,32], index: 4, kind: input, shape index: {}]
  %s5 = inlined_call_operand.vmem [shape: f32[32,1], index: 5, kind: input, shape index: {}]
  %s6 = inlined_call_operand.<no memory space> [shape: f32[1,1], index: 6, kind: input, shape index: {}]
  %s7 = inlined_call_operand.hbm [shape: f32[1,8], index: 7, kind: output, shape index: {}]
  %s8 = sld [smem:[#allocation0]]
  $region38: #{tpu_custom_call.1} parent=0
    _
  %s10 = ssub.s32 1, %s8
  %s11 = scalar_select 0, %s10, %s8
  %v12 = vstv %s6
  %13 = vst [vmem:[#allocation2] sm:$0x1] %v12
  $region1: #{tpu_custom_call.1} parent=0
    #allocation3 [shape = 'u8[512]{0}', space=vmem, size = 0x400, scoped, tag = 'output window, operand 0, single buffered']
    #allocation4 [shape = 's32[1]{0}', space=sflag, size = 0x4, scoped, tag = 'scoped memory for tpu_custom_call.1']
    %14 = vsyncpa [#allocation4], 0
    // Predicated region
    $region2: #{tpu_custom_call.1} parent=1 // pred_check
      _
    $region3: #{tpu_custom_call.1} parent=1 // pred_check_branch
      %16 = sbr.rel (0) target = $region5
    $region4: #{tpu_custom_call.1} parent=1 // pred_region
      _
    $region5: #{tpu_custom_call.1} parent=1 // pred_fallthru
      _
    // Predicated region
    $region6: #{tpu_custom_call.1} parent=1 // pred_check
      _
    $region7: #{tpu_custom_call.1} parent=1 // pred_check_branch
      %18 = sbr.rel (0) target = $region9
    $region8: #{tpu_custom_call.1} parent=1 // pred_region
      _
    $region9: #{tpu_custom_call.1} parent=1 // pred_fallthru
      _
    // Predicated region
    $region10: #{tpu_custom_call.1} parent=1 // pred_check
      _
    $region11: #{tpu_custom_call.1} parent=1 // pred_check_branch
      %20 = sbr.rel (0) target = $region13
    $region12: #{tpu_custom_call.1} parent=1 // pred_region
      _
    $region13: #{tpu_custom_call.1} parent=1 // pred_fallthru
      _
    // Predicated region
    $region14: #{tpu_custom_call.1} parent=1 // pred_check
      _
    $region15: #{tpu_custom_call.1} parent=1 // pred_check_branch
      %22 = sbr.rel (0) target = $region17
    $region16: #{tpu_custom_call.1} parent=1 // pred_region
      _
    $region17: #{tpu_custom_call.1} parent=1 // pred_fallthru
      _
    // Predicated region
    $region18: #{tpu_custom_call.1} parent=1 // pred_check
      _
    $region19: #{tpu_custom_call.1} parent=1 // pred_check_branch
      %24 = sbr.rel (0) target = $region21
    $region20: #{tpu_custom_call.1} parent=1 // pred_region
      _
    $region21: #{tpu_custom_call.1} parent=1 // pred_fallthru
      _
    // Predicated region
    $region22: #{tpu_custom_call.1} parent=1 // pred_check
      _
    $region23: #{tpu_custom_call.1} parent=1 // pred_check_branch
      %26 = sbr.rel (0) target = $region25
    $region24: #{tpu_custom_call.1} parent=1 // pred_region
      _
    $region25: #{tpu_custom_call.1} parent=1 // pred_fallthru
      _
    // Predicated region
    $region26: #{tpu_custom_call.1} parent=1 // pred_check
      _
    $region27: #{tpu_custom_call.1} parent=1 // pred_check_branch
      %28 = sbr.rel (0) target = $region29
    $region28: #{tpu_custom_call.1} parent=1 // pred_region
      _
    $region29: #{tpu_custom_call.1} parent=1 // pred_fallthru
      _
    %v29 = vld [vmem:[%s0] sm:$0x7]
    %v30 = vld [vmem:[%s1] sm:$0x1]
    %v31 = vld [vmem:[%s2] sm:$0xff]
    %v32 = vld [vmem:[%s2 + $0x8] sm:$0xff]
    %v33 = vld [vmem:[%s2 + $0x10] sm:$0xff]
    %v34 = vld [vmem:[%s2 + $0x18] sm:$0xff]
    %v35 = vld [vmem:[%s3] sm:$0xff]
    %v36 = vld [vmem:[%s3 + $0x8] sm:$0xff]
    %v37 = vld [vmem:[%s3 + $0x10] sm:$0xff]
    %v38 = vld [vmem:[%s3 + $0x18] sm:$0xff]
    %40 = vset.pattern.permute.xlu0 0
    %41 = vperm.xlu0 %40, %v31
    %v42 = vpop.permute.xlu0 %41
    %45 = vset.pattern.permute.xlu0 0
    %46 = vperm.xlu0 %45, %v32
    %v47 = vpop.permute.xlu0 %46
    %50 = vset.pattern.permute.xlu0 0
    %51 = vperm.xlu0 %50, %v33
    %v52 = vpop.permute.xlu0 %51
    %55 = vset.pattern.permute.xlu0 0
    %56 = vperm.xlu0 %55, %v34
    %v57 = vpop.permute.xlu0 %56
    %v59 = vlaneseq
    %v60 = vshrl.u32 %v59, 7
    %v61 = vsub.s32 0, %v60
    %v62 = vrot.slane %v29, %v61
    %v63 = vmul.f32 %v42, %v62
    %v64 = vmul.f32 %v47, %v62
    %v65 = vmul.f32 %v52, %v62
    %v66 = vmul.f32 %v57, %v62
    %67 = vset.pattern.permute.xlu0 1
    %68 = vperm.xlu0 %67, %v31
    %v69 = vpop.permute.xlu0 %68
    %71 = vset.pattern.permute.xlu0 1
    %72 = vperm.xlu0 %71, %v32
    %v73 = vpop.permute.xlu0 %72
    %75 = vset.pattern.permute.xlu0 1
    %76 = vperm.xlu0 %75, %v33
    %v77 = vpop.permute.xlu0 %76
    %79 = vset.pattern.permute.xlu0 1
    %80 = vperm.xlu0 %79, %v34
    %v81 = vpop.permute.xlu0 %80
    %v83 = vlaneseq
    %v84 = vshrl.u32 %v83, 7
    %v85 = vsub.s32 1, %v84
    %v86 = vrot.slane %v29, %v85
    %v87 = vmul.f32 %v69, %v86
    %v88 = vmul.f32 %v73, %v86
    %v89 = vmul.f32 %v77, %v86
    %v90 = vmul.f32 %v81, %v86
    %v91 = vadd.f32 %v63, %v87
    %v92 = vadd.f32 %v64, %v88
    %v93 = vadd.f32 %v65, %v89
    %v94 = vadd.f32 %v66, %v90
    %95 = vset.pattern.permute.xlu0 2
    %96 = vperm.xlu0 %95, %v31
    %v97 = vpop.permute.xlu0 %96
    %99 = vset.pattern.permute.xlu0 2
    %100 = vperm.xlu0 %99, %v32
    %v101 = vpop.permute.xlu0 %100
    %103 = vset.pattern.permute.xlu0 2
    %104 = vperm.xlu0 %103, %v33
    %v105 = vpop.permute.xlu0 %104
    %107 = vset.pattern.permute.xlu0 2
    %108 = vperm.xlu0 %107, %v34
    %v109 = vpop.permute.xlu0 %108
    %v111 = vlaneseq
    %v112 = vshrl.u32 %v111, 7
    %v113 = vsub.s32 2, %v112
    %v114 = vrot.slane %v29, %v113
    %v115 = vmul.f32 %v97, %v114
    %v116 = vmul.f32 %v101, %v114
    %v117 = vmul.f32 %v105, %v114
    %v118 = vmul.f32 %v109, %v114
    %v119 = vadd.f32 %v91, %v115
    %v120 = vadd.f32 %v92, %v116
    %v121 = vadd.f32 %v93, %v117
    %v122 = vadd.f32 %v94, %v118
    %123 = vset.pattern.permute.xlu0 3
    %124 = vperm.xlu0 %123, %v31
    %v125 = vpop.permute.xlu0 %124
    %127 = vset.pattern.permute.xlu0 3
    %128 = vperm.xlu0 %127, %v32
    %v129 = vpop.permute.xlu0 %128
    %131 = vset.pattern.permute.xlu0 3
    %132 = vperm.xlu0 %131, %v33
    %v133 = vpop.permute.xlu0 %132
    %135 = vset.pattern.permute.xlu0 3
    %136 = vperm.xlu0 %135, %v34
    %v137 = vpop.permute.xlu0 %136
    %v140 = vlaneseq
    %v141 = vshrl.u32 %v140, 7
    %v142 = vsub.s32 0, %v141
    %v143 = vrot.slane %v30, %v142
    %v145 = vmul.f32 %v125, %v143
    %v146 = vmul.f32 %v129, %v143
    %v147 = vmul.f32 %v133, %v143
    %v148 = vmul.f32 %v137, %v143
    %v149 = vadd.f32 %v119, %v145
    %v150 = vadd.f32 %v120, %v146
    %v151 = vadd.f32 %v121, %v147
    %v152 = vadd.f32 %v122, %v148
    %154 = vset.pattern.permute.xlu0 0
    %155 = vperm.xlu0 %154, %v35
    %v156 = vpop.permute.xlu0 %155
    %159 = vset.pattern.permute.xlu0 0
    %160 = vperm.xlu0 %159, %v36
    %v161 = vpop.permute.xlu0 %160
    %164 = vset.pattern.permute.xlu0 0
    %165 = vperm.xlu0 %164, %v37
    %v166 = vpop.permute.xlu0 %165
    %169 = vset.pattern.permute.xlu0 0
    %170 = vperm.xlu0 %169, %v38
    %v171 = vpop.permute.xlu0 %170
    %v173 = vadd.f32 %v149, %v156
    %v174 = vadd.f32 %v150, %v161
    %v175 = vadd.f32 %v151, %v166
    %v176 = vadd.f32 %v152, %v171
    %v177 = vmax.f32 %v173, 0.0
    %v178 = vmax.f32 %v174, 0.0
    %v179 = vmax.f32 %v175, 0.0
    %v180 = vmax.f32 %v176, 0.0
    %v181 = vld [vmem:[%s4] sm:$0xff]
    %v182 = vld [vmem:[%s4 + $0x8] sm:$0xff]
    %v183 = vld [vmem:[%s4 + $0x10] sm:$0xff]
    %v184 = vld [vmem:[%s4 + $0x18] sm:$0xff]
    %185 = vset.pattern.permute.xlu0 1
    %186 = vperm.xlu0 %185, %v35
    %v187 = vpop.permute.xlu0 %186
    %189 = vset.pattern.permute.xlu0 1
    %190 = vperm.xlu0 %189, %v36
    %v191 = vpop.permute.xlu0 %190
    %193 = vset.pattern.permute.xlu0 1
    %194 = vperm.xlu0 %193, %v37
    %v195 = vpop.permute.xlu0 %194
    %197 = vset.pattern.permute.xlu0 1
    %198 = vperm.xlu0 %197, %v38
    %v199 = vpop.permute.xlu0 %198
    %vm201 = vcmask 261120
    %v203 = vsel %vm201, %v181, 0
    %v206 = vsel %vm201, %v182, 0
    %v209 = vsel %vm201, %v183, 0
    %v212 = vsel %vm201, %v184, 0
    %214 = vmatprep.subr.mxu0 0.0
    %215 = vmatpush1.msra.mxu0 %v177
    %216 = vmatprep.subr.mxu0 0.0
    %217 = vmatpush1.msra.mxu0 %v178
    %218 = vmatprep.subr.mxu0 0.0
    %219 = vmatpush1.msra.mxu0 %v179
    %220 = vmatprep.subr.mxu0 0.0
    %221 = vmatpush1.msra.mxu0 %v180
    %222 = vmatprep.subr.mxu0 0.0
    %223 = vmatpush1.msra.mxu0 0.0
    %224 = vmatprep.subr.mxu0 0.0
    %225 = vmatpush1.msra.mxu0 0.0
    %226 = vmatprep.subr.mxu0 0.0
    %227 = vmatpush1.msra.mxu0 0.0
    %228 = vmatprep.subr.mxu0 0.0
    %229 = vmatpush1.msra.mxu0 0.0
    %230 = vmatprep.subr.mxu0 0.0
    %231 = vmatpush1.msra.mxu0 0.0
    %232 = vmatprep.subr.mxu0 0.0
    %233 = vmatpush1.msra.mxu0 0.0
    %234 = vmatprep.subr.mxu0 0.0
    %235 = vmatpush1.msra.mxu0 0.0
    %236 = vmatprep.subr.mxu0 0.0
    %237 = vmatpush1.msra.mxu0 0.0
    %238 = vmatprep.subr.mxu0 0.0
    %239 = vmatpush1.msra.mxu0 0.0
    %240 = vmatprep.subr.mxu0 0.0
    %241 = vmatpush1.msra.mxu0 0.0
    %242 = vmatprep.subr.mxu0 0.0
    %243 = vmatpush1.msra.mxu0 0.0
    %244 = vmatprep.subr.mxu0 0.0
    %245 = vmatpush1.msra.mxu0 0.0
    %246 = vmatprep.subr.mxu0 0.0
    %247 = vmatpush1.msra.mxu0 0.0
    %248 = vmatprep.subr.mxu0 0.0
    %249 = vmatpush1.msra.mxu0 0.0
    %250 = vmatprep.subr.mxu0 0.0
    %251 = vmatpush1.msra.mxu0 0.0
    %252 = vmatprep.subr.mxu0 0.0
    %253 = vmatpush1.msra.mxu0 0.0
    %254 = vmatprep.subr.mxu0 0.0
    %255 = vmatpush1.msra.mxu0 0.0
    %256 = vmatprep.subr.mxu0 0.0
    %257 = vmatpush1.msra.mxu0 0.0
    %258 = vmatprep.subr.mxu0 0.0
    %259 = vmatpush1.msra.mxu0 0.0
    %260 = vmatprep.subr.mxu0 0.0
    %261 = vmatpush1.msra.mxu0 0.0
    %262 = vmatprep.subr.mxu0 0.0
    %263 = vmatpush1.msra.mxu0 0.0
    %264 = vmatprep.subr.mxu0 0.0
    %265 = vmatpush1.msra.mxu0 0.0
    %266 = vmatprep.subr.mxu0 0.0
    %267 = vmatpush1.msra.mxu0 0.0
    %268 = vmatprep.subr.mxu0 0.0
    %269 = vmatpush1.msra.mxu0 0.0
    %270 = vmatprep.subr.mxu0 0.0
    %271 = vmatpush1.msra.mxu0 0.0
    %272 = vmatprep.subr.mxu0 0.0
    %273 = vmatpush1.msra.mxu0 0.0
    %274 = vmatprep.subr.mxu0 0.0
    %275 = vmatpush1.msra.mxu0 0.0
    %276 = vmatprep.subr.mxu0 0.0
    %277 = vmatpush1.msra.mxu0 0.0
    %278 = vmatprep.mubr.f32.mxu0 0.0
    %279 = vmatmul.mubr.f32.gmra.mrb[0].mxu0 %v203
    %v280 = vpop.f32.mrb[0].mxu0
    %v281 = vadd.f32 %v187, %v280
    %v282 = vpop.f32.mrb[0].mxu0
    %283 = vmatprep.mubr.f32.mxu0 0.0
    %284 = vmatmul.mubr.f32.gmra.mrb[0].mxu0 %v206
    %v285 = vpop.f32.mrb[0].mxu0
    %v286 = vadd.f32 %v191, %v285
    %v287 = vpop.f32.mrb[0].mxu0
    %288 = vmatprep.mubr.f32.mxu0 0.0
    %289 = vmatmul.mubr.f32.gmra.mrb[0].mxu0 %v209
    %v290 = vpop.f32.mrb[0].mxu0
    %v291 = vadd.f32 %v195, %v290
    %v292 = vpop.f32.mrb[0].mxu0
    %293 = vmatprep.mubr.f32.mxu0 0.0
    %294 = vmatmul.mubr.f32.gmra.mrb[0].mxu0 %v212
    %v295 = vpop.f32.mrb[0].mxu0
    %v296 = vadd.f32 %v199, %v295
    %v297 = vpop.f32.mrb[0].mxu0
    %298 = vdwg.mxu0
    %v299 = vmax.f32 %v281, 0.0
    %v300 = vmax.f32 %v286, 0.0
    %v301 = vmax.f32 %v291, 0.0
    %v302 = vmax.f32 %v296, 0.0
    %v303 = vld [vmem:[%s5] sm:$0xff]
    %v304 = vld [vmem:[%s5 + $0x8] sm:$0xff]
    %v305 = vld [vmem:[%s5 + $0x10] sm:$0xff]
    %v306 = vld [vmem:[%s5 + $0x18] sm:$0xff]
    %308 = vset.pattern.permute.xlu0 0
    %309 = vperm.xlu0 %308, %v303
    %v310 = vpop.permute.xlu0 %309
    %313 = vset.pattern.permute.xlu0 0
    %314 = vperm.xlu0 %313, %v304
    %v315 = vpop.permute.xlu0 %314
    %318 = vset.pattern.permute.xlu0 0
    %319 = vperm.xlu0 %318, %v305
    %v320 = vpop.permute.xlu0 %319
    %323 = vset.pattern.permute.xlu0 0
    %324 = vperm.xlu0 %323, %v306
    %v325 = vpop.permute.xlu0 %324
    %v327 = vmul.f32 %v299, %v310
    %v328 = vmul.f32 %v300, %v315
    %v329 = vmul.f32 %v301, %v320
    %v330 = vmul.f32 %v302, %v325
    %vm331 = vcmask 64512
    %v332 = vsel %vm331, %v327, 0.0
    %v333 = vsel %vm331, %v328, 0.0
    %v334 = vadd.f32 %v332, %v333
    %v335 = vsel %vm331, %v329, 0.0
    %v336 = vadd.f32 %v334, %v335
    %v337 = vsel %vm331, %v330, 0.0
    %v338 = vadd.f32 %v336, %v337
    %v339 = vrot.slane %v338, 4
    %v340 = vadd.f32 %v338, %v339
    %v341 = vrot.slane %v340, 2
    %v342 = vadd.f32 %v340, %v341
    %v343 = vrot.slane %v342, 1
    %v344 = vadd.f32 %v342, %v343
    %v345 = vld [vmem:[#allocation2] sm:$0x1]
    %347 = vset.pattern.permute.xlu0 0
    %348 = vperm.xlu0 %347, %v345
    %v349 = vpop.permute.xlu0 %348
    %v351 = vlaneseq
    %v352 = vshrl.u32 %v351, 7
    %v353 = vsub.s32 0, %v352
    %v354 = vrot.slane %v349, %v353
    %v355 = vadd.f32 %v344, %v354
    %vm356 = vcmask 57344
    %357 = vst.msk [vmem:[#allocation3] sm:$0x1] %vm356, %v355
    // Predicated region
    $region30: #{tpu_custom_call.1} parent=1 // pred_check
      _
    $region31: #{tpu_custom_call.1} parent=1 // pred_check_branch
      %359 = sbr.rel (0) target = $region33
    $region32: #{tpu_custom_call.1} parent=1 // pred_region
      %s361 = ssub.s32 16, 16
      %362 = vsyncadd [#allocation4], %s361
      %s364 = sshll.u32 [#allocation3], 4
      %s365 = int_to_ptr.vmem [resolvable:$true] %s364
      %367 = dma.vmem_to_hbm [thread:$0]  %s365, 16, %s7, [#allocation4]
    $region33: #{tpu_custom_call.1} parent=1 // pred_fallthru
      _
    // Predicated region
    $region34: #{tpu_custom_call.1} parent=1 // pred_check
      _
    $region35: #{tpu_custom_call.1} parent=1 // pred_check_branch
      %369 = sbr.rel (0) target = $region37
    $region36: #{tpu_custom_call.1} parent=1 // pred_region
      %370 = dma.done [#allocation4], 16
    $region37: #{tpu_custom_call.1} parent=1 // pred_fallthru
      _
    %371 = vsyncpa [#allocation4], 1

</llo_original>
